<compile_context>
chip_gen: v7x
topology: tpu7x:2x2x1
jax: 0.10.0
libtpu: 0.0.40
codegen_flags: <defaults>
</compile_context>

<pallas_src>
import math
from functools import partial

import jax
import jax.numpy as jnp
from jax.experimental import pallas as pl
from jax.experimental.pallas import tpu as pltpu


def _mlp_kernel(x_ref, w1t_ref, b1_ref, w2t_ref, b2_ref, o_ref, *,
                approximate_gelu):
    # x_ref: (Cin, TT) input dtype   w1t_ref: (Chid, Cin) bf16   b1_ref: (Chid, 1) f32
    # w2t_ref: (Cout, Chid) bf16     b2_ref: (Cout, 1) f32       o_ref: (Cout, TT)
    x = x_ref[...].astype(jnp.bfloat16)                       # bf16 MXU operand
    h = jnp.dot(w1t_ref[...], x, preferred_element_type=jnp.float32)
    h = h + b1_ref[...]                                       # lane-broadcast bias
    if approximate_gelu:
        # tanh-form GELU -> tanh issues on the EUP slot, keeps the VPU free.
        h = jax.nn.gelu(h, approximate=True)
    else:
        # Exact erf GELU (torch.nn.GELU() default) -- VALU-bound polynomial.
        h = 0.5 * h * (1.0 + jax.lax.erf(h * jnp.float32(1.0 / math.sqrt(2.0))))
    y = jnp.dot(w2t_ref[...], h.astype(jnp.bfloat16),
                preferred_element_type=jnp.float32)
    y = y + b2_ref[...]
    o_ref[...] = y.astype(o_ref.dtype)


def _round_up(v, m):
    return ((v + m - 1) // m) * m


def _choose_token_tile(hw, batch, max_tile):
    """Pick a lane-aligned token tile TT and step count n_t (HW padded to n_t*TT)."""
    max_tile = max(128, (max_tile // 128) * 128)
    hw128 = _round_up(hw, 128)
    tt = min(max_tile, hw128)
    n_t = -(-hw128 // tt)
    # Guarantee >=2 total parallel grid steps when possible so both v7x
    # TensorCores get work (no effect on v5e/v6e, which have 1 TC).
    if batch * n_t < 2 and hw128 >= 256:
        tt = _round_up(hw128 // 2, 128)
        n_t = -(-hw128 // tt)
    return tt, n_t


def mlp_pallas(x_nchw, w1t, b1, w2t, b2, *, max_tile=8192, approximate_gelu=True):
    """x_nchw: [B, Cin, H, W]; w1t: [Chid, Cin]; b1: [Chid]; w2t: [Cout, Chid]; b2: [Cout]."""
    B, Cin, H, W = x_nchw.shape
    Chid = w1t.shape[0]
    Cout = w2t.shape[0]
    HW = H * W

    TT, n_t = _choose_token_tile(HW, B, max_tile)
    HWp = TT * n_t
    pad = HWp - HW

    # Channel-major tokens; NCHW is contiguous over H*W so this is layout-cheap.
    x_tok = x_nchw.reshape(B, Cin, HW)
    if pad:
        x_tok = jnp.pad(x_tok, ((0, 0), (0, 0), (0, pad)))

    # Cast weights to bf16 once (not per grid step); biases stay f32 (added to
    # the f32 accumulator).
    w1t_bf = w1t.astype(jnp.bfloat16)
    w2t_bf = w2t.astype(jnp.bfloat16)
    b1_2d = b1.reshape(Chid, 1).astype(jnp.float32)
    b2_2d = b2.reshape(Cout, 1).astype(jnp.float32)

    grid = (B, n_t)

    itemsize = jnp.dtype(x_nchw.dtype).itemsize
    flops = 2 * B * HWp * (Cin * Chid + Chid * Cout)
    bytes_accessed = (itemsize * (B * Cin * HWp + B * Cout * HWp)
                      + 2 * (Cin * Chid + Chid * Cout)
                      + 4 * (Chid + Cout))

    out = pl.pallas_call(
        partial(_mlp_kernel, approximate_gelu=approximate_gelu),
        out_shape=jax.ShapeDtypeStruct((B, Cout, HWp), x_nchw.dtype),
        grid_spec=pltpu.PrefetchScalarGridSpec(
            num_scalar_prefetch=0,
            grid=grid,
            in_specs=[
                pl.BlockSpec((None, Cin, TT), lambda b, t: (b, 0, t)),
                pl.BlockSpec((Chid, Cin), lambda b, t: (0, 0)),
                pl.BlockSpec((Chid, 1), lambda b, t: (0, 0)),
                pl.BlockSpec((Cout, Chid), lambda b, t: (0, 0)),
                pl.BlockSpec((Cout, 1), lambda b, t: (0, 0)),
            ],
            out_specs=pl.BlockSpec((None, Cout, TT), lambda b, t: (b, 0, t)),
        ),
        compiler_params=pltpu.CompilerParams(
            dimension_semantics=("parallel", "parallel")),
        cost_estimate=pl.CostEstimate(
            flops=flops,
            transcendentals=B * HWp * Chid,
            bytes_accessed=bytes_accessed),
    )(x_tok, w1t_bf, b1_2d, w2t_bf, b2_2d)

    if pad:
        out = out[:, :, :HW]
    return out.reshape(B, Cout, H, W)


def _xavier_uniform(key, fan_in, fan_out, shape):
    bound = math.sqrt(6.0 / (fan_in + fan_out))
    return jax.random.uniform(key, shape, jnp.float32, -bound, bound)


if __name__ == "__main__":
    # Module config: in_features=4, hidden_features=32, out_features=4
    B, Cin, H, W = 2, 4, 16, 16
    Chid, Cout = 32, 4

    key = jax.random.PRNGKey(0)
    kx, kw1, kw2 = jax.random.split(key, 3)

    x = jax.random.normal(kx, (B, Cin, H, W), jnp.float32)

    # Conv2d(k=1) weights stored as [out_ch, in_ch] (PyTorch conv layout with
    # the 1x1 spatial dims squeezed) -- used directly as W^T by the kernel.
    w1_conv = _xavier_uniform(kw1, fan_in=Cin, fan_out=Chid, shape=(Chid, Cin))
    b1 = jnp.zeros((Chid,), jnp.float32)
    w2_conv = _xavier_uniform(kw2, fan_in=Chid, fan_out=Cout, shape=(Cout, Chid))
    b2 = jnp.zeros((Cout,), jnp.float32)

    y = mlp_pallas(x, w1_conv, b1, w2_conv, b2)
    y = jax.block_until_ready(y)
    assert y.shape == (B, Cout, H, W)

    # --- Reference 1: exact numerics replica (bf16 MXU operands, f32 acc,
    # tanh GELU) -> tight tolerance.
    x_flat = jnp.transpose(x, (0, 2, 3, 1)).reshape(-1, Cin)
    h_rep = jnp.dot(x_flat.astype(jnp.bfloat16), w1_conv.astype(jnp.bfloat16).T,
                    preferred_element_type=jnp.float32) + b1
    h_rep = jax.nn.gelu(h_rep, approximate=True)
    rep = jnp.dot(h_rep.astype(jnp.bfloat16), w2_conv.astype(jnp.bfloat16).T,
                  preferred_element_type=jnp.float32) + b2
    rep = rep.reshape(B, H, W, Cout).transpose(0, 3, 1, 2)
    err_rep = float(jnp.max(jnp.abs(y - rep)))
    assert err_rep < 1e-3, f"replica mismatch: {err_rep}"

    # --- Reference 2: torch.nn module semantics (f32 math, exact-erf GELU)
    # -> loose sanity tolerance (bf16 MXU + tanh-GELU deviation).
    h32 = x_flat @ w1_conv.T + b1
    h32 = 0.5 * h32 * (1.0 + jax.lax.erf(h32 / math.sqrt(2.0)))
    ref = (h32 @ w2_conv.T + b2).reshape(B, H, W, Cout).transpose(0, 3, 1, 2)
    err_ref = float(jnp.max(jnp.abs(y - ref)))
    assert err_ref < 1e-1, f"torch-semantics sanity mismatch: {err_ref}"

    print("KERNEL_OK")
</pallas_src>

<mosaic_0001>
module attributes {stable_mosaic.version = 11 : i64} {
  func.func @_mlp_kernel(%arg0: i32, %arg1: i32, %arg2: memref<1x4x256xf32, #tpu.memory_space<vmem>>, %arg3: memref<32x4xbf16, #tpu.memory_space<vmem>>, %arg4: memref<32x1xf32, #tpu.memory_space<vmem>>, %arg5: memref<4x32xbf16, #tpu.memory_space<vmem>>, %arg6: memref<4x1xf32, #tpu.memory_space<vmem>>, %arg7: memref<1x4x256xf32, #tpu.memory_space<vmem>>) attributes {dimension_semantics = [#tpu.dimension_semantics<parallel>, #tpu.dimension_semantics<parallel>], iteration_bounds = array<i64: 2, 1>, scalar_prefetch = 0 : i64, scratch_operands = 0 : i64, tpu.core_type = #tpu.core_type<tc>, window_params = [{transform_indices = @transform_0, window_bounds = array<i64: 1, 4, 256>}, {pipeline_mode = #tpu.pipeline_mode<synchronous>, transform_indices = @transform_1, window_bounds = array<i64: 32, 4>}, {pipeline_mode = #tpu.pipeline_mode<synchronous>, transform_indices = @transform_2, window_bounds = array<i64: 32, 1>}, {pipeline_mode = #tpu.pipeline_mode<synchronous>, transform_indices = @transform_3, window_bounds = array<i64: 4, 32>}, {pipeline_mode = #tpu.pipeline_mode<synchronous>, transform_indices = @transform_4, window_bounds = array<i64: 4, 1>}, {transform_indices = @transform_5, window_bounds = array<i64: 1, 4, 256>}]} {
    %c0 = arith.constant 0 : index
    %c0_0 = arith.constant 0 : index
    %c0_1 = arith.constant 0 : index
    %0 = vector.load %arg2[%c0, %c0_0, %c0_1] : memref<1x4x256xf32, #tpu.memory_space<vmem>>, vector<1x4x256xf32>
    %1 = vector.shape_cast %0 : vector<1x4x256xf32> to vector<4x256xf32>
    %2 = arith.truncf %1 : vector<4x256xf32> to vector<4x256xbf16>
    %c0_2 = arith.constant 0 : index
    %c0_3 = arith.constant 0 : index
    %3 = vector.load %arg3[%c0_2, %c0_3] : memref<32x4xbf16, #tpu.memory_space<vmem>>, vector<32x4xbf16>
    %cst = arith.constant dense<0.000000e+00> : vector<32x256xf32>
    %4 = tpu.matmul %3, %2, %cst {dimension_numbers = #tpu.dot_dimension_numbers<[1], [0], [0], [1], [0, 0, 1, 1], [], []>} : vector<32x4xbf16>, vector<4x256xbf16>, vector<32x256xf32> -> vector<32x256xf32>
    %c0_4 = arith.constant 0 : index
    %c0_5 = arith.constant 0 : index
    %5 = vector.load %arg4[%c0_4, %c0_5] : memref<32x1xf32, #tpu.memory_space<vmem>>, vector<32x1xf32>
    %6 = vector.broadcast %5 : vector<32x1xf32> to vector<32x256xf32>
    %7 = arith.addf %4, %6 : vector<32x256xf32>
    %8 = arith.mulf %7, %7 : vector<32x256xf32>
    %9 = arith.mulf %7, %8 : vector<32x256xf32>
    %cst_6 = arith.constant 4.471500e-02 : f32
    %10 = vector.broadcast %cst_6 : f32 to vector<32x256xf32>
    %11 = arith.mulf %10, %9 : vector<32x256xf32>
    %12 = arith.addf %7, %11 : vector<32x256xf32>
    %cst_7 = arith.constant 0.797884583 : f32
    %13 = vector.broadcast %cst_7 : f32 to vector<32x256xf32>
    %14 = arith.mulf %13, %12 : vector<32x256xf32>
    %15 = math.tanh %14 : vector<32x256xf32>
    %cst_8 = arith.constant 1.000000e+00 : f32
    %16 = vector.broadcast %cst_8 : f32 to vector<32x256xf32>
    %17 = arith.addf %16, %15 : vector<32x256xf32>
    %cst_9 = arith.constant 5.000000e-01 : f32
    %18 = vector.broadcast %cst_9 : f32 to vector<32x256xf32>
    %19 = arith.mulf %18, %17 : vector<32x256xf32>
    %20 = arith.mulf %7, %19 : vector<32x256xf32>
    %c0_10 = arith.constant 0 : index
    %c0_11 = arith.constant 0 : index
    %21 = vector.load %arg5[%c0_10, %c0_11] : memref<4x32xbf16, #tpu.memory_space<vmem>>, vector<4x32xbf16>
    %22 = arith.truncf %20 : vector<32x256xf32> to vector<32x256xbf16>
    %cst_12 = arith.constant dense<0.000000e+00> : vector<4x256xf32>
    %23 = tpu.matmul %21, %22, %cst_12 {dimension_numbers = #tpu.dot_dimension_numbers<[1], [0], [0], [1], [0, 0, 1, 1], [], []>} : vector<4x32xbf16>, vector<32x256xbf16>, vector<4x256xf32> -> vector<4x256xf32>
    %c0_13 = arith.constant 0 : index
    %c0_14 = arith.constant 0 : index
    %24 = vector.load %arg6[%c0_13, %c0_14] : memref<4x1xf32, #tpu.memory_space<vmem>>, vector<4x1xf32>
    %25 = vector.broadcast %24 : vector<4x1xf32> to vector<4x256xf32>
    %26 = arith.addf %23, %25 : vector<4x256xf32>
    %c0_15 = arith.constant 0 : index
    %c0_16 = arith.constant 0 : index
    %c0_17 = arith.constant 0 : index
    %27 = vector.load %arg7[%c0_15, %c0_16, %c0_17] : memref<1x4x256xf32, #tpu.memory_space<vmem>>, vector<1x4x256xf32>
    %28 = vector.shape_cast %27 : vector<1x4x256xf32> to vector<4x256xf32>
    %29 = vector.shape_cast %26 : vector<4x256xf32> to vector<1x4x256xf32>
    tpu.vector_store %arg7[%c0_15, %c0_16, %c0_17], %29 {strides = array<i32>} : memref<1x4x256xf32, #tpu.memory_space<vmem>>, vector<1x4x256xf32>,
    return
  }
  func.func @transform_0(%arg0: i32, %arg1: i32) -> (i32, i32, i32) {
    %c0_i32 = arith.constant 0 : i32
    %c0_i32_0 = arith.constant 0 : i32
    return %arg0, %c0_i32, %arg1 : i32, i32, i32
  }
  func.func @transform_1(%arg0: i32, %arg1: i32) -> (i32, i32) {
    %c0_i32 = arith.constant 0 : i32
    %c0_i32_0 = arith.constant 0 : i32
    %c0_i32_1 = arith.constant 0 : i32
    return %c0_i32, %c0_i32_0 : i32, i32
  }
  func.func @transform_2(%arg0: i32, %arg1: i32) -> (i32, i32) {
    %c0_i32 = arith.constant 0 : i32
    %c0_i32_0 = arith.constant 0 : i32
    %c0_i32_1 = arith.constant 0 : i32
    return %c0_i32, %c0_i32_0 : i32, i32
  }
  func.func @transform_3(%arg0: i32, %arg1: i32) -> (i32, i32) {
    %c0_i32 = arith.constant 0 : i32
    %c0_i32_0 = arith.constant 0 : i32
    %c0_i32_1 = arith.constant 0 : i32
    return %c0_i32, %c0_i32_0 : i32, i32
  }
  func.func @transform_4(%arg0: i32, %arg1: i32) -> (i32, i32) {
    %c0_i32 = arith.constant 0 : i32
    %c0_i32_0 = arith.constant 0 : i32
    %c0_i32_1 = arith.constant 0 : i32
    return %c0_i32, %c0_i32_0 : i32, i32
  }
  func.func @transform_5(%arg0: i32, %arg1: i32) -> (i32, i32, i32) {
    %c0_i32 = arith.constant 0 : i32
    %c0_i32_0 = arith.constant 0 : i32
    return %arg0, %c0_i32, %arg1 : i32, i32, i32
  }
}

</mosaic_0001>

<llo_original>
// kernel: tpu_custom_call.1
$region0: #{tpu_custom_call.1}
  #allocation0 [shape = 'u32[]', space=smem, size = 0x4, offset = 0x4, fixed_abs, tag = 'smem constant byte address 0x4 - core index']
  #allocation1 [shape = 'u32[144,128]{1,0:T(1,128)}', space=vmem, size = 0x12000, scoped, tag = 'internal scratch']
  %s0 = inlined_call_operand.vmem [shape: f32[2,4,256], index: 0, kind: input, shape index: {}]
  %s1 = inlined_call_operand.vmem [shape: bf16[32,4], index: 1, kind: input, shape index: {}]
  %s2 = inlined_call_operand.vmem [shape: f32[32,1], index: 2, kind: input, shape index: {}]
  %s3 = inlined_call_operand.vmem [shape: bf16[4,32], index: 3, kind: input, shape index: {}]
  %s4 = inlined_call_operand.vmem [shape: f32[4,1], index: 4, kind: input, shape index: {}]
  %s5 = inlined_call_operand.hbm [shape: f32[2,4,256], index: 5, kind: output, shape index: {}]
  %s6 = sld [smem:[#allocation0]]
  $region53: #{tpu_custom_call.1} parent=0
    _
  %s8 = ssub.s32 1, %s6
  %s9 = scalar_select 0, %s8, %s6
  $region1: #{tpu_custom_call.1} parent=0
    #allocation2 [shape = 'u8[8192]{0}', space=vmem, size = 0x2000, scoped, tag = 'output window, operand 0']
    #allocation3 [shape = 's32[2]{0}', space=sflag, size = 0x8, scoped, tag = 'scoped memory for tpu_custom_call.1']
    %10 = vsyncpa [#allocation3], 0
    %s11 = scalar_lea.sflag [#allocation3], 1
    %12 = vsyncpa %s11, 0
    loop: start=0, step=1, limit=4
    $region2: #{tpu_custom_call.1} parent=1 // loop_pre_header
      _
    $region3: #{tpu_custom_call.1} parent=1 // loop_header
      %s14 = sphi 0, %s18
      %p15 = scmp.ge.s32.totalorder %s14, 4
      %s21 = sphi 0, %s33
      %s22 = sphi 0, %s29
      %s23 = sphi 0, %s21
      %s24 = sphi 0, %s22
      %s25 = sphi 0, %s23
      %s26 = sphi 0, %s24
      %s38 = sphi 0, %s40
      %s41 = sphi 0, %s38
      %s42 = sphi 0, %s41
      %s58 = sphi 0, %s42
      %s62 = sphi 0, %s62
      %s64 = sphi 0, %s62
      %s65 = sphi 0, %s64
      %s79 = sphi 0, %s65
      %s83 = sphi 0, %s83
      %s85 = sphi 0, %s83
      %s86 = sphi 0, %s85
      %s100 = sphi 0, %s86
      %s104 = sphi 0, %s104
      %s106 = sphi 0, %s104
      %s107 = sphi 0, %s106
      %s121 = sphi 0, %s107
      %s125 = sphi 0, %s125
      %s127 = sphi 0, %s125
      %s128 = sphi 0, %s127
      %s142 = sphi 0, %s128
      %s150 = sphi 0, %s152
      %s153 = sphi 0, %s150
      %s154 = sphi 0, %s153
      %s170 = sphi 0, %s154
    $region4: #{tpu_custom_call.1} parent=1 // loop_header_branch
      %17 = sbr.rel (%p15) target = $region8
    $region5: #{tpu_custom_call.1} parent=1 // loop_body
      %s19 = ssub.s32 %s14, 1
      %s20 = ssub.s32 %s14, 2
      %s27 = sadd.s32 1, %s22
      %p28 = scmp.ge.s32.totalorder %s27, 1
      %s29 = scalar_select %p28, 0, %s27
      %s30 = sadd.s32 1, %s21
      %s31 = scalar_select %p28, %s30, %s21
      %p32 = scmp.ge.s32.totalorder %s31, 2
      %s33 = scalar_select %p32, 0, %s31
      %s34 = ssub.s32 %s21, %s33
      %s35 = ssub.s32 %s22, %s29
      %s36 = sor.u32 %s34, %s35
      %p37 = scmp.eq.s32.totalorder %s36, 0
      %s39 = sadd.s32 %s38, 1
      %s40 = scalar_select %p37, %s38, %s39
      %p43 = pneg %p37
      %p44 = scmp.eq.s32.totalorder %s14, 1
      %p45 = por %p43, %p44
      %p46 = scmp.ne.s32.totalorder %s38, %s41
      %p47 = scmp.eq.s32.totalorder %s14, 0
      %p48 = por %p46, %p47
      %p49 = scmp.ne.s32.totalorder %s38, %s41
      %p50 = scmp.eq.s32.totalorder %s19, 1
      %p51 = por %p49, %p50
      %p52 = scmp.ne.s32.totalorder %s41, %s42
      %p53 = scmp.eq.s32.totalorder %s19, 0
      %p54 = por %p52, %p53
      %p55 = scmp.ne.s32.totalorder %s41, %s42
      %p56 = scmp.eq.s32.totalorder %s20, 1
      %p57 = por %p55, %p56
      %p59 = scmp.ne.s32.totalorder %s42, %s58
      %p60 = scmp.eq.s32.totalorder %s20, 0
      %p61 = por %p59, %p60
      %s63 = sadd.s32 %s62, 1
      %p66 = scmp.eq.s32.totalorder %s14, 1
      %p67 = scmp.ne.s32.totalorder %s62, %s64
      %p68 = scmp.eq.s32.totalorder %s14, 0
      %p69 = por %p67, %p68
      %p70 = scmp.ne.s32.totalorder %s62, %s64
      %p71 = scmp.eq.s32.totalorder %s19, 1
      %p72 = por %p70, %p71
      %p73 = scmp.ne.s32.totalorder %s64, %s65
      %p74 = scmp.eq.s32.totalorder %s19, 0
      %p75 = por %p73, %p74
      %p76 = scmp.ne.s32.totalorder %s64, %s65
      %p77 = scmp.eq.s32.totalorder %s20, 1
      %p78 = por %p76, %p77
      %p80 = scmp.ne.s32.totalorder %s65, %s79
      %p81 = scmp.eq.s32.totalorder %s20, 0
      %p82 = por %p80, %p81
      %s84 = sadd.s32 %s83, 1
      %p87 = scmp.eq.s32.totalorder %s14, 1
      %p88 = scmp.ne.s32.totalorder %s83, %s85
      %p89 = scmp.eq.s32.totalorder %s14, 0
      %p90 = por %p88, %p89
      %p91 = scmp.ne.s32.totalorder %s83, %s85
      %p92 = scmp.eq.s32.totalorder %s19, 1
      %p93 = por %p91, %p92
      %p94 = scmp.ne.s32.totalorder %s85, %s86
      %p95 = scmp.eq.s32.totalorder %s19, 0
      %p96 = por %p94, %p95
      %p97 = scmp.ne.s32.totalorder %s85, %s86
      %p98 = scmp.eq.s32.totalorder %s20, 1
      %p99 = por %p97, %p98
      %p101 = scmp.ne.s32.totalorder %s86, %s100
      %p102 = scmp.eq.s32.totalorder %s20, 0
      %p103 = por %p101, %p102
      %s105 = sadd.s32 %s104, 1
      %p108 = scmp.eq.s32.totalorder %s14, 1
      %p109 = scmp.ne.s32.totalorder %s104, %s106
      %p110 = scmp.eq.s32.totalorder %s14, 0
      %p111 = por %p109, %p110
      %p112 = scmp.ne.s32.totalorder %s104, %s106
      %p113 = scmp.eq.s32.totalorder %s19, 1
      %p114 = por %p112, %p113
      %p115 = scmp.ne.s32.totalorder %s106, %s107
      %p116 = scmp.eq.s32.totalorder %s19, 0
      %p117 = por %p115, %p116
      %p118 = scmp.ne.s32.totalorder %s106, %s107
      %p119 = scmp.eq.s32.totalorder %s20, 1
      %p120 = por %p118, %p119
      %p122 = scmp.ne.s32.totalorder %s107, %s121
      %p123 = scmp.eq.s32.totalorder %s20, 0
      %p124 = por %p122, %p123
      %s126 = sadd.s32 %s125, 1
      %p129 = scmp.eq.s32.totalorder %s14, 1
      %p130 = scmp.ne.s32.totalorder %s125, %s127
      %p131 = scmp.eq.s32.totalorder %s14, 0
      %p132 = por %p130, %p131
      %p133 = scmp.ne.s32.totalorder %s125, %s127
      %p134 = scmp.eq.s32.totalorder %s19, 1
      %p135 = por %p133, %p134
      %p136 = scmp.ne.s32.totalorder %s127, %s128
      %p137 = scmp.eq.s32.totalorder %s19, 0
      %p138 = por %p136, %p137
      %p139 = scmp.ne.s32.totalorder %s127, %s128
      %p140 = scmp.eq.s32.totalorder %s20, 1
      %p141 = por %p139, %p140
      %p143 = scmp.ne.s32.totalorder %s128, %s142
      %p144 = scmp.eq.s32.totalorder %s20, 0
      %p145 = por %p143, %p144
      %s146 = ssub.s32 %s21, %s33
      %s147 = ssub.s32 %s22, %s29
      %s148 = sor.u32 %s146, %s147
      %p149 = scmp.eq.s32.totalorder %s148, 0
      %s151 = sadd.s32 %s150, 1
      %s152 = scalar_select %p149, %s150, %s151
      %p155 = pneg %p149
      %p156 = scmp.eq.s32.totalorder %s14, 1
      %p157 = por %p155, %p156
      %p158 = scmp.ne.s32.totalorder %s150, %s153
      %p159 = scmp.eq.s32.totalorder %s14, 0
      %p160 = por %p158, %p159
      %p161 = scmp.ne.s32.totalorder %s150, %s153
      %p162 = scmp.eq.s32.totalorder %s19, 1
      %p163 = por %p161, %p162
      %p164 = scmp.ne.s32.totalorder %s153, %s154
      %p165 = scmp.eq.s32.totalorder %s19, 0
      %p166 = por %p164, %p165
      %p167 = scmp.ne.s32.totalorder %s153, %s154
      %p168 = scmp.eq.s32.totalorder %s20, 1
      %p169 = por %p167, %p168
      %p171 = scmp.ne.s32.totalorder %s154, %s170
      %p172 = scmp.eq.s32.totalorder %s20, 0
      %p173 = por %p171, %p172
      %p174 = scmp.le.s32.totalorder 1, %s14
      %p175 = scmp.lt.s32.totalorder %s14, 3
      %p176 = pnand %p174, %p175
      %p177 = pneg %p176
      // Predicated region
      $region9: #{tpu_custom_call.1} parent=5 // pred_check
        _
      $region10: #{tpu_custom_call.1} parent=5 // pred_check_branch
        %179 = sbr.rel (%p176) target = $region12
      $region11: #{tpu_custom_call.1} parent=5 // pred_region
        %s180 = ssub.s32 %s14, 1
        // Predicated region
        $region13: #{tpu_custom_call.1} parent=11 // pred_check
          %p181 = pneg %p75
        $region14: #{tpu_custom_call.1} parent=11 // pred_check_branch
          %183 = sbr.rel (%p181) target = $region16
        $region15: #{tpu_custom_call.1} parent=11 // pred_region
          _
        $region16: #{tpu_custom_call.1} parent=11 // pred_fallthru
          _
        // Predicated region
        $region17: #{tpu_custom_call.1} parent=11 // pred_check
          %p184 = pneg %p96
        $region18: #{tpu_custom_call.1} parent=11 // pred_check_branch
          %186 = sbr.rel (%p184) target = $region20
        $region19: #{tpu_custom_call.1} parent=11 // pred_region
          _
        $region20: #{tpu_custom_call.1} parent=11 // pred_fallthru
          _
        // Predicated region
        $region21: #{tpu_custom_call.1} parent=11 // pred_check
          %p187 = pneg %p117
        $region22: #{tpu_custom_call.1} parent=11 // pred_check_branch
          %189 = sbr.rel (%p187) target = $region24
        $region23: #{tpu_custom_call.1} parent=11 // pred_region
          _
        $region24: #{tpu_custom_call.1} parent=11 // pred_fallthru
          _
        // Predicated region
        $region25: #{tpu_custom_call.1} parent=11 // pred_check
          %p190 = pneg %p138
        $region26: #{tpu_custom_call.1} parent=11 // pred_check_branch
          %192 = sbr.rel (%p190) target = $region28
        $region27: #{tpu_custom_call.1} parent=11 // pred_region
          _
        $region28: #{tpu_custom_call.1} parent=11 // pred_fallthru
          _
      $region12: #{tpu_custom_call.1} parent=5 // pred_fallthru
        _
      %p193 = scmp.lt.s32.totalorder %s14, 2
      // Predicated region
      $region29: #{tpu_custom_call.1} parent=5 // pred_check
        %p194 = pneg %p193
      $region30: #{tpu_custom_call.1} parent=5 // pred_check_branch
        %196 = sbr.rel (%p194) target = $region32
      $region31: #{tpu_custom_call.1} parent=5 // pred_region
        // Predicated region
        $region33: #{tpu_custom_call.1} parent=31 // pred_check
          %p197 = pneg %p48
        $region34: #{tpu_custom_call.1} parent=31 // pred_check_branch
          %199 = sbr.rel (%p197) target = $region36
        $region35: #{tpu_custom_call.1} parent=31 // pred_region
          %s200 = smul.u32 2, %s22
          %p201 = scmp.lt.s32.totalorder %s21, 1
          %s202 = scalar_select %p201, %s21, 1
          %p203 = scmp.lt.s32.totalorder %s200, 1
          %s204 = scalar_select %p203, %s200, 1
          %s205 = smul.addr %s202, 2
          %s206 = sadd.s32 %s204, %s205
          %s207 = smul.addr %s206, 4
          %s208 = scalar_lea.vmem %s0, %s207
          %s209 = smul.u32 2, %s22
        $region36: #{tpu_custom_call.1} parent=31 // pred_fallthru
          _
      $region32: #{tpu_custom_call.1} parent=5 // pred_fallthru
        _
      %p210 = scmp.le.s32.totalorder 1, %s14
      %p211 = scmp.lt.s32.totalorder %s14, 3
      %p212 = pnand %p210, %p211
      %p213 = pneg %p212
      // Predicated region
      $region37: #{tpu_custom_call.1} parent=5 // pred_check
        _
      $region38: #{tpu_custom_call.1} parent=5 // pred_check_branch
        %215 = sbr.rel (%p212) target = $region40
      $region39: #{tpu_custom_call.1} parent=5 // pred_region
        %s216 = ssub.s32 %s14, 1
        %s217 = smul.u32 2, %s24
        %p218 = scmp.lt.s32.totalorder %s23, 1
        %s219 = scalar_select %p218, %s23, 1
        %p220 = scmp.lt.s32.totalorder %s217, 1
        %s221 = scalar_select %p220, %s217, 1
        %s222 = smul.addr %s219, 2
        %s223 = sadd.s32 %s221, %s222
        %s224 = smul.addr %s223, 4
        %s225 = scalar_lea.vmem %s0, %s224
        %p226 = pneg %p54
        %p227 = pneg %p51
        %p228 = pneg %p75
        %p229 = pneg %p72
        %p230 = pneg %p96
        %p231 = pneg %p93
        %p232 = pneg %p117
        %p233 = pneg %p114
        %p234 = pneg %p138
        %p235 = pneg %p135
        %p236 = pneg %p166
        %p237 = pneg %p163
        %s238 = sand.u32 %s153, 1
        %s239 = scalar_lea.sflag [#allocation3], %s238
        %s240 = sand.u32 %s153, 1
        %s241 = smul.addr %s240, 8
        %s242 = scalar_lea.vmem [#allocation2], %s241
        %s243 = smul.u32 2, %s24
        %p244 = scmp.lt.s32.totalorder %s23, 1
        %s245 = scalar_select %p244, %s23, 1
        %p246 = scmp.lt.s32.totalorder %s243, 1
        %s247 = scalar_select %p246, %s243, 1
        %s248 = smul.addr %s245, 2
        %s249 = sadd.s32 %s247, %s248
        %s250 = smul.addr %s249, 4
        %s251 = scalar_lea.vmem %s0, %s250
        %s252 = smul.u32 2, %s24
        %s253 = smul.u32 2, %s24
        %v255 = vld [vmem:[%s251] sm:$0xff]
        %v257 = vcombine.high %v255, %v255
        %v259 = vpack.c.bf16 %v255, %v255
        %v260 = vpack.c.bf16 %v257, %v257
        %v261 = vld [vmem:[%s1] sm:$0xf]
        %v262 = vld [vmem:[%s1 + $0x4] sm:$0xf]
        %v263 = vld [vmem:[%s1 + $0x8] sm:$0xf]
        %v264 = vld [vmem:[%s1 + $0xc] sm:$0xf]
        %v265 = vld [vmem:[%s2] sm:$0xff]
        %v266 = vld [vmem:[%s2 + $0x8] sm:$0xff]
        %v267 = vld [vmem:[%s2 + $0x10] sm:$0xff]
        %v268 = vld [vmem:[%s2 + $0x18] sm:$0xff]
        %270 = vset.pattern.permute.xlu0 0
        %271 = vperm.xlu0 %270, %v265
        %v272 = vpop.permute.xlu0 %271
        %275 = vset.pattern.permute.xlu0 0
        %276 = vperm.xlu0 %275, %v266
        %v277 = vpop.permute.xlu0 %276
        %280 = vset.pattern.permute.xlu0 0
        %281 = vperm.xlu0 %280, %v267
        %v282 = vpop.permute.xlu0 %281
        %285 = vset.pattern.permute.xlu0 0
        %286 = vperm.xlu0 %285, %v268
        %v287 = vpop.permute.xlu0 %286
        %v293 = vunpack.c.l.b16 %v261
        %v294 = vunpack.c.l.b16 %v262
        %v295 = vunpack.c.l.b16 %v263
        %v296 = vunpack.c.l.b16 %v264
        %v297 = vpack.c.b16 %v294, %v293
        %v298 = vpack.c.b16 %v296, %v295
        %vm299 = vcmask 31744
        %v301 = vsel %vm299, %v297, 0
        %v304 = vsel %vm299, %v298, 0
        %vm306 = vcmask 1041408
        %v308 = vsel %vm306, %v259, 0
        %v311 = vsel %vm306, %v260, 0
        %313 = vmatprep.subr.bf16.mxu0 %v311
        %314 = vmatpush1.bf16.msra.mxu0 %v308
        %315 = vmatprep.subr.bf16.mxu0 0
        %316 = vmatpush1.bf16.msra.mxu0 0
        %317 = vmatprep.subr.bf16.mxu0 0
        %318 = vmatpush1.bf16.msra.mxu0 0
        %319 = vmatprep.subr.bf16.mxu0 0
        %320 = vmatpush1.bf16.msra.mxu0 0
        %321 = vmatprep.subr.bf16.mxu0 0
        %322 = vmatpush1.bf16.msra.mxu0 0
        %323 = vmatprep.subr.bf16.mxu0 0
        %324 = vmatpush1.bf16.msra.mxu0 0
        %325 = vmatprep.subr.bf16.mxu0 0
        %326 = vmatpush1.bf16.msra.mxu0 0
        %327 = vmatprep.subr.bf16.mxu0 0
        %328 = vmatpush1.bf16.msra.mxu0 0
        %329 = vmatprep.subr.bf16.mxu0 0
        %330 = vmatpush1.bf16.msra.mxu0 0
        %331 = vmatprep.subr.bf16.mxu0 0
        %332 = vmatpush1.bf16.msra.mxu0 0
        %333 = vmatprep.subr.bf16.mxu0 0
        %334 = vmatpush1.bf16.msra.mxu0 0
        %335 = vmatprep.subr.bf16.mxu0 0
        %336 = vmatpush1.bf16.msra.mxu0 0
        %337 = vmatprep.subr.bf16.mxu0 0
        %338 = vmatpush1.bf16.msra.mxu0 0
        %339 = vmatprep.subr.bf16.mxu0 0
        %340 = vmatpush1.bf16.msra.mxu0 0
        %341 = vmatprep.subr.bf16.mxu0 0
        %342 = vmatpush1.bf16.msra.mxu0 0
        %343 = vmatprep.subr.bf16.mxu0 0
        %344 = vmatpush1.bf16.msra.mxu0 0
        %345 = vmatprep.mubr.bf16.mxu0 0
        %346 = vmatmul.mubr.bf16.gmra.mrb[0].mxu0 %v301
        %v347 = vpop.f32.mrb[0].mxu0
        %v348 = vadd.f32 %v272, %v347
        %v349 = vpop.f32.mrb[0].mxu0
        %v350 = vadd.f32 %v272, %v349
        %v351 = vpop.f32.mrb[0].mxu0
        %v352 = vadd.f32 %v277, %v351
        %v353 = vpop.f32.mrb[0].mxu0
        %v354 = vadd.f32 %v277, %v353
        %355 = vmatprep.mubr.bf16.mxu0 0
        %356 = vmatmul.mubr.bf16.gmra.mrb[0].mxu0 %v304
        %v357 = vpop.f32.mrb[0].mxu0
        %v358 = vadd.f32 %v282, %v357
        %v359 = vpop.f32.mrb[0].mxu0
        %v360 = vadd.f32 %v282, %v359
        %v361 = vpop.f32.mrb[0].mxu0
        %v362 = vadd.f32 %v287, %v361
        %v363 = vpop.f32.mrb[0].mxu0
        %v364 = vadd.f32 %v287, %v363
        %365 = vdwg.mxu0
        %v366 = vmul.f32 %v348, %v348
        %v367 = vmul.f32 %v350, %v350
        %v368 = vmul.f32 %v352, %v352
        %v369 = vmul.f32 %v354, %v354
        %v370 = vmul.f32 %v358, %v358
        %v371 = vmul.f32 %v360, %v360
        %v372 = vmul.f32 %v362, %v362
        %v373 = vmul.f32 %v364, %v364
        %v374 = vmul.f32 %v348, %v366
        %v375 = vmul.f32 %v350, %v367
        %v376 = vmul.f32 %v352, %v368
        %v377 = vmul.f32 %v354, %v369
        %v378 = vmul.f32 %v358, %v370
        %v379 = vmul.f32 %v360, %v371
        %v380 = vmul.f32 %v362, %v372
        %v381 = vmul.f32 %v364, %v373
        %v382 = vmul.f32 %v374, 0.044715
        %v383 = vmul.f32 %v375, 0.044715
        %v384 = vmul.f32 %v376, 0.044715
        %v385 = vmul.f32 %v377, 0.044715
        %v386 = vmul.f32 %v378, 0.044715
        %v387 = vmul.f32 %v379, 0.044715
        %v388 = vmul.f32 %v380, 0.044715
        %v389 = vmul.f32 %v381, 0.044715
        %v390 = vadd.f32 %v348, %v382
        %v391 = vadd.f32 %v350, %v383
        %v392 = vadd.f32 %v352, %v384
        %v393 = vadd.f32 %v354, %v385
        %v394 = vadd.f32 %v358, %v386
        %v395 = vadd.f32 %v360, %v387
        %v396 = vadd.f32 %v362, %v388
        %v397 = vadd.f32 %v364, %v389
        %v398 = vmul.f32 %v390, 0.7978846
        %v399 = vmul.f32 %v391, 0.7978846
        %v400 = vmul.f32 %v392, 0.7978846
        %v401 = vmul.f32 %v393, 0.7978846
        %v402 = vmul.f32 %v394, 0.7978846
        %v403 = vmul.f32 %v395, 0.7978846
        %v404 = vmul.f32 %v396, 0.7978846
        %v405 = vmul.f32 %v397, 0.7978846
        %v406 = vtanh.pop %v398
        %v407 = vtanh.pop %v399
        %v408 = vtanh.pop %v400
        %v409 = vtanh.pop %v401
        %v410 = vtanh.pop %v402
        %v411 = vtanh.pop %v403
        %v412 = vtanh.pop %v404
        %v413 = vtanh.pop %v405
        %v414 = vadd.f32 %v406, 1.0
        %v415 = vadd.f32 %v407, 1.0
        %v416 = vadd.f32 %v408, 1.0
        %v417 = vadd.f32 %v409, 1.0
        %v418 = vadd.f32 %v410, 1.0
        %v419 = vadd.f32 %v411, 1.0
        %v420 = vadd.f32 %v412, 1.0
        %v421 = vadd.f32 %v413, 1.0
        %v422 = vmul.f32 %v414, 0.5
        %v423 = vmul.f32 %v415, 0.5
        %v424 = vmul.f32 %v416, 0.5
        %v425 = vmul.f32 %v417, 0.5
        %v426 = vmul.f32 %v418, 0.5
        %v427 = vmul.f32 %v419, 0.5
        %v428 = vmul.f32 %v420, 0.5
        %v429 = vmul.f32 %v421, 0.5
        %v430 = vmul.f32 %v348, %v422
        %v431 = vmul.f32 %v350, %v423
        %v432 = vmul.f32 %v352, %v424
        %v433 = vmul.f32 %v354, %v425
        %v434 = vmul.f32 %v358, %v426
        %v435 = vmul.f32 %v360, %v427
        %v436 = vmul.f32 %v362, %v428
        %v437 = vmul.f32 %v364, %v429
        %v438 = vld [vmem:[%s3] sm:$0x3]
        %v439 = vpack.c.bf16 %v432, %v430
        %v440 = vpack.c.bf16 %v433, %v431
        %v441 = vpack.c.bf16 %v436, %v434
        %v442 = vpack.c.bf16 %v437, %v435
        %v443 = vld [vmem:[%s4] sm:$0xf]
        %445 = vset.pattern.permute.xlu0 0
        %446 = vperm.xlu0 %445, %v443
        %v447 = vpop.permute.xlu0 %446
        %vm449 = vcmask 261120
        %v451 = vsel %vm449, %v438, 0
        %453 = vmatprep.subr.bf16.mxu0 %v440
        %454 = vmatpush1.bf16.msra.mxu0 %v439
        %455 = vmatprep.subr.bf16.mxu0 %v442
        %456 = vmatpush1.bf16.msra.mxu0 %v441
        %457 = vmatprep.subr.bf16.mxu0 0
        %458 = vmatpush1.bf16.msra.mxu0 0
        %459 = vmatprep.subr.bf16.mxu0 0
        %460 = vmatpush1.bf16.msra.mxu0 0
        %461 = vmatprep.subr.bf16.mxu0 0
        %462 = vmatpush1.bf16.msra.mxu0 0
        %463 = vmatprep.subr.bf16.mxu0 0
        %464 = vmatpush1.bf16.msra.mxu0 0
        %465 = vmatprep.subr.bf16.mxu0 0
        %466 = vmatpush1.bf16.msra.mxu0 0
        %467 = vmatprep.subr.bf16.mxu0 0
        %468 = vmatpush1.bf16.msra.mxu0 0
        %469 = vmatprep.subr.bf16.mxu0 0
        %470 = vmatpush1.bf16.msra.mxu0 0
        %471 = vmatprep.subr.bf16.mxu0 0
        %472 = vmatpush1.bf16.msra.mxu0 0
        %473 = vmatprep.subr.bf16.mxu0 0
        %474 = vmatpush1.bf16.msra.mxu0 0
        %475 = vmatprep.subr.bf16.mxu0 0
        %476 = vmatpush1.bf16.msra.mxu0 0
        %477 = vmatprep.subr.bf16.mxu0 0
        %478 = vmatpush1.bf16.msra.mxu0 0
        %479 = vmatprep.subr.bf16.mxu0 0
        %480 = vmatpush1.bf16.msra.mxu0 0
        %481 = vmatprep.subr.bf16.mxu0 0
        %482 = vmatpush1.bf16.msra.mxu0 0
        %483 = vmatprep.subr.bf16.mxu0 0
        %484 = vmatpush1.bf16.msra.mxu0 0
        %485 = vmatprep.mubr.bf16.mxu0 0
        %486 = vmatmul.mubr.bf16.gmra.mrb[0].mxu0 %v451
        %v487 = vpop.f32.mrb[0].mxu0
        %v488 = vadd.f32 %v447, %v487
        %v489 = vpop.f32.mrb[0].mxu0
        %v490 = vadd.f32 %v447, %v489
        %v491 = vpop.f32.mrb[0].mxu0
        %v492 = vpop.f32.mrb[0].mxu0
        %493 = vdwg.mxu0
        %v496 = vcombine.low %v488, %v490
        %498 = vst [vmem:[%s242] sm:$0xff] %v496
        %s499 = sand.u32 %s153, 1
        %s500 = scalar_lea.sflag [#allocation3], %s499
        %s501 = sand.u32 %s153, 1
        %s502 = smul.addr %s501, 8
        %s503 = scalar_lea.vmem [#allocation2], %s502
        // Predicated region
        $region41: #{tpu_custom_call.1} parent=39 // pred_check
          %p504 = pneg %p163
        $region42: #{tpu_custom_call.1} parent=39 // pred_check_branch
          %506 = sbr.rel (%p504) target = $region44
        $region43: #{tpu_custom_call.1} parent=39 // pred_region
          %s507 = smul.u32 2, %s24
          %s509 = ssub.s32 128, 128
          %510 = vsyncadd %s500, %s509
          %s511 = smul.addr %s23, 2
          %s512 = sadd.s32 %s507, %s511
          %s513 = smul.addr %s512, 64
          %s514 = scalar_lea.hbm %s5, %s513
          %s516 = sshll.u32 %s503, 4
          %s517 = int_to_ptr.vmem [resolvable:$true] %s516
          %519 = dma.vmem_to_hbm [thread:$0]  %s517, 128, %s514, %s500
        $region44: #{tpu_custom_call.1} parent=39 // pred_fallthru
          _
      $region40: #{tpu_custom_call.1} parent=5 // pred_fallthru
        _
      %p520 = scmp.le.s32.totalorder 2, %s14
      // Predicated region
      $region45: #{tpu_custom_call.1} parent=5 // pred_check
        %p521 = pneg %p520
      $region46: #{tpu_custom_call.1} parent=5 // pred_check_branch
        %523 = sbr.rel (%p521) target = $region48
      $region47: #{tpu_custom_call.1} parent=5 // pred_region
        %s524 = ssub.s32 %s14, 2
        // Predicated region
        $region49: #{tpu_custom_call.1} parent=47 // pred_check
          %p525 = pneg %p169
        $region50: #{tpu_custom_call.1} parent=47 // pred_check_branch
          %527 = sbr.rel (%p525) target = $region52
        $region51: #{tpu_custom_call.1} parent=47 // pred_region
          %s528 = sand.u32 %s154, 1
          %s529 = scalar_lea.sflag [#allocation3], %s528
          %s530 = sand.u32 %s154, 1
          %s531 = smul.addr %s530, 8
          %s532 = scalar_lea.vmem [#allocation2], %s531
          %533 = dma.done %s529, 128
        $region52: #{tpu_custom_call.1} parent=47 // pred_fallthru
          _
      $region48: #{tpu_custom_call.1} parent=5 // pred_fallthru
        _
    $region6: #{tpu_custom_call.1} parent=1 // loop_footer
      %s18 = sadd.s32 1, %s14
    $region7: #{tpu_custom_call.1} parent=1 // loop_footer_branch
      %13 = sbr.rel target = $region3
    $region8: #{tpu_custom_call.1} parent=1 // loop_exit
      _
    %534 = vsyncpa [#allocation3], 1
    %s535 = scalar_lea.sflag [#allocation3], 1
    %536 = vsyncpa %s535, 1

</llo_original>
